<compile_context>
chip_gen: v6e
topology: v6e:2x2x1
jax: 0.10.0
libtpu: 0.0.40
codegen_flags: <defaults>
</compile_context>

<pallas_src>
import functools
import math

import jax
import jax.numpy as jnp
from jax import lax
from jax.experimental import pallas as pl
from jax.experimental.pallas import tpu as pltpu


def _pred_kernel(x_ref, w1t_ref, b1_ref, w2t_ref, b2_ref, o_ref, *,
                 num_anchors, group):
    """One grid step: `group` batches of the fused 1x1-conv prediction head.

    x_ref  : (group, Cin, HW)  features; channels on sublanes, H*W on lanes
    w1t_ref: (hd, Cin)         conv1 weight, transposed
    b1_ref : (hd, 1)
    w2t_ref: (Cout, hd)        conv2 weight, transposed
    b2_ref : (Cout, 1)
    o_ref  : (group, Cout, HW) output, already channels-first
    """
    w1t = w1t_ref[...]
    w2t = w2t_ref[...]
    b1 = b1_ref[...].astype(jnp.float32)
    b2 = b2_ref[...].astype(jnp.float32)

    cout = o_ref.shape[1]
    # Per-output-channel masks built once at (Cout, 1); broadcast over HW lanes.
    #   channel c < 5*A : anchor component d = c % 5
    #     d in {0,1,2} -> sigmoid ; d in {1,2} -> additionally subtract 0.5
    #   channel c >= 5*A (class scores): passthrough
    ch = lax.broadcasted_iota(jnp.int32, (cout, 1), 0)
    comp = ch % 5
    is_anchor = ch < 5 * num_anchors
    sig_mask = is_anchor & (comp < 3)
    sub_half = jnp.where(is_anchor & (comp >= 1) & (comp < 3),
                         jnp.float32(0.5), jnp.float32(0.0))

    for g in range(group):                                 # unrolled; group is small
        x = x_ref[g]                                       # (Cin, HW)
        # conv1 (1x1) == matmul over channels, f32 accumulation on the MXU.
        h = jnp.dot(w1t, x, preferred_element_type=jnp.float32) + b1      # (hd, HW)
        # Dropout2d is identity in eval / inference mode.
        # TODO(synk): training-mode Dropout2d (random channel zeroing) not implemented.
        h = jnp.where(h > 0, h, 0.01 * h)                  # LeakyReLU (slope 0.01), f32
        h = h.astype(w2t.dtype)                            # bf16 MXU path when weights are bf16
        # conv2 (1x1)
        z = jnp.dot(w2t, h, preferred_element_type=jnp.float32) + b2      # (Cout, HW)

        # sigmoid via EUP exp + approx reciprocal (keeps the divide off the VALU)
        sig = pl.reciprocal(1.0 + jnp.exp(-z), approx=True)
        y = jnp.where(sig_mask, sig, z) - sub_half
        o_ref[g] = y.astype(o_ref.dtype)


def _pick_group(batch, bytes_per_batch, target_bytes=512 * 1024, max_group=8):
    """Largest divisor of `batch` that keeps >= 2 grid steps (dual-TC chips),
    bounded so one step stays near `target_bytes` of input and <= max_group."""
    want = max(1, min(max_group, target_bytes // max(1, bytes_per_batch)))
    best = 1
    for g in range(1, batch + 1):
        if g > want:
            break
        if batch % g:
            continue
        if batch // g >= 2 or batch == 1:
            best = g
    return best


def init_params(key, in_dim, hidden_dim, out_dim):
    """Deterministic Conv2d-style (kaiming-uniform-ish) init."""
    k1, k2, k3, k4 = jax.random.split(key, 4)
    lim1 = 1.0 / math.sqrt(in_dim)
    w1 = jax.random.uniform(k1, (in_dim, hidden_dim), jnp.float32, -lim1, lim1)
    b1 = jax.random.uniform(k2, (hidden_dim,), jnp.float32, -lim1, lim1)
    lim2 = 1.0 / math.sqrt(hidden_dim)
    w2 = jax.random.uniform(k3, (hidden_dim, out_dim), jnp.float32, -lim2, lim2)
    b2 = jax.random.uniform(k4, (out_dim,), jnp.float32, -lim2, lim2)
    return w1, b1, w2, b2


def prediction_network_forward(features, params, num_anchors, num_classes,
                               pos_anchor_idx=None, neg_anchor_idx=None,
                               group=None):
    """Replicates PredictionNetwork.forward.

    features: (B, in_dim, H, W) float32 or bfloat16 (NCHW, like PyTorch).
    params:   w1 (in_dim, hidden), b1 (hidden,), w2 (hidden, cout), b2 (cout,)
    """
    w1, b1, w2, b2 = params
    B, cin, H, W = features.shape
    hd = w1.shape[1]
    cout = w2.shape[1]
    A = num_anchors
    C = num_classes
    assert cout == 5 * A + C
    HW = H * W

    # Free (contiguous) reshape: stay in NCHW order, no transpose, no extra copy.
    x = features.reshape(B, cin, HW)
    w1t = jnp.transpose(w1)                      # (hd, cin)   tiny
    w2t = jnp.transpose(w2)                      # (cout, hd)  tiny
    b1c = b1.reshape(hd, 1).astype(jnp.float32)
    b2c = b2.reshape(cout, 1).astype(jnp.float32)

    if group is None:
        group = _pick_group(B, cin * HW * features.dtype.itemsize)
    assert B % group == 0
    grid = B // group

    out = pl.pallas_call(
        functools.partial(_pred_kernel, num_anchors=A, group=group),
        out_shape=jax.ShapeDtypeStruct((B, cout, HW), jnp.float32),
        grid_spec=pltpu.PrefetchScalarGridSpec(
            num_scalar_prefetch=0,
            grid=(grid,),
            in_specs=[
                pl.BlockSpec((group, cin, HW), lambda i: (i, 0, 0)),
                pl.BlockSpec((hd, cin), lambda i: (0, 0)),
                pl.BlockSpec((hd, 1), lambda i: (0, 0)),
                pl.BlockSpec((cout, hd), lambda i: (0, 0)),
                pl.BlockSpec((cout, 1), lambda i: (0, 0)),
            ],
            out_specs=pl.BlockSpec((group, cout, HW), lambda i: (i, 0, 0)),
        ),
        compiler_params=pltpu.CompilerParams(
            dimension_semantics=("parallel",)),
    )(x, w1t, b1c, w2t, b2c)

    out = out.reshape(B, cout, H, W)                         # free reshape
    # Same as all_scores[:, :5A].view(B, A, 5, H, W) — channel order is (a, d).
    anchor_data = out[:, :5 * A].reshape(B, A, 5, H, W)
    all_class_scores = out[:, 5 * A:]                        # (B, C, H, W)

    if pos_anchor_idx is not None and neg_anchor_idx is not None:
        # Training path: gather extraction (plain-JAX glue; same semantics as
        # _extract_anchor_data / _extract_class_scores in the reference module).
        flat = jnp.transpose(anchor_data, (0, 1, 3, 4, 2)).reshape(-1, 5)
        pos = flat[pos_anchor_idx]
        neg = flat[neg_anchor_idx]
        conf_scores = jnp.concatenate([pos[:, :1], neg[:, :1]], axis=0)  # (2M, 1)
        offsets = pos[:, 1:]                                             # (M, 4)
        cls = jnp.transpose(all_class_scores, (0, 2, 3, 1))              # (B,H,W,C)
        cls = jnp.broadcast_to(cls[:, None], (B, A, H, W, C)).reshape(
            B * A * H * W, C)
        class_scores = cls[pos_anchor_idx]                               # (M, C)
        return conf_scores, offsets, class_scores
    else:
        conf_scores = anchor_data[:, :, 0, :, :]     # (B, A, H, W)
        offsets = anchor_data[:, :, 1:5, :, :]       # (B, A, 4, H, W)
        return conf_scores, offsets, all_class_scores


def _reference_forward(features, params, num_anchors):
    """Plain-JAX reference of the eval-mode forward (for a numeric sanity check)."""
    w1, b1, w2, b2 = params
    B, cin, H, W = features.shape
    A = num_anchors
    x = jnp.transpose(features, (0, 2, 3, 1)).astype(jnp.float32)   # (B,H,W,cin)
    h = x @ w1.astype(jnp.float32) + b1.astype(jnp.float32)
    h = jnp.where(h > 0, h, 0.01 * h)
    z = h @ w2.astype(jnp.float32) + b2.astype(jnp.float32)         # (B,H,W,cout)
    z = jnp.transpose(z, (0, 3, 1, 2))                              # (B,cout,H,W)
    anchor = z[:, :5 * A].reshape(B, A, 5, H, W)
    anchor = anchor.at[:, :, :3].set(jax.nn.sigmoid(anchor[:, :, :3]))
    anchor = anchor.at[:, :, 1:3].add(-0.5)
    conf = anchor[:, :, 0]
    offs = anchor[:, :, 1:5]
    cls = z[:, 5 * A:]
    return conf, offs, cls


if __name__ == "__main__":
    key = jax.random.PRNGKey(0)
    k_feat, k_param, k_pos, k_neg = jax.random.split(key, 4)

    # Small shapes consistent with the module: features (B, in_dim, 7, 7)
    B, in_dim, H, W = 2, 32, 7, 7
    hidden_dim = 32
    num_anchors = 9
    num_classes = 20
    out_dim = 5 * num_anchors + num_classes  # 65

    features = jax.random.normal(k_feat, (B, in_dim, H, W), dtype=jnp.float32)
    params = init_params(k_param, in_dim, hidden_dim, out_dim)

    # --- Inference mode (f32) ---
    conf, offs, cls = prediction_network_forward(
        features, params, num_anchors, num_classes)
    jax.block_until_ready((conf, offs, cls))
    assert conf.shape == (B, num_anchors, H, W)
    assert offs.shape == (B, num_anchors, 4, H, W)
    assert cls.shape == (B, num_classes, H, W)

    # Numeric sanity check vs plain-JAX reference (loose tol: approx reciprocal
    # + possible bf16-pass MXU rounding).
    conf_r, offs_r, cls_r = _reference_forward(features, params, num_anchors)
    for a, b in ((conf, conf_r), (offs, offs_r), (cls, cls_r)):
        err = float(jnp.max(jnp.abs(a - b)))
        assert err < 5e-2, f"max abs err {err}"

    # --- Inference mode with bf16 streams (f32 accumulate / elementwise) ---
    feat_bf16 = features.astype(jnp.bfloat16)
    params_bf16 = tuple(p.astype(jnp.bfloat16) for p in params)
    conf_b, offs_b, cls_b = prediction_network_forward(
        feat_bf16, params_bf16, num_anchors, num_classes)
    jax.block_until_ready((conf_b, offs_b, cls_b))
    assert conf_b.shape == (B, num_anchors, H, W)
    assert offs_b.shape == (B, num_anchors, 4, H, W)
    assert cls_b.shape == (B, num_classes, H, W)

    # --- Training mode (anchor extraction) ---
    M = 6
    total = B * num_anchors * H * W
    pos_idx = jax.random.randint(k_pos, (M,), 0, total)
    neg_idx = jax.random.randint(k_neg, (M,), 0, total)
    conf_t, offs_t, cls_t = prediction_network_forward(
        features, params, num_anchors, num_classes,
        pos_anchor_idx=pos_idx, neg_anchor_idx=neg_idx)
    jax.block_until_ready((conf_t, offs_t, cls_t))
    assert conf_t.shape == (2 * M, 1)
    assert offs_t.shape == (M, 4)
    assert cls_t.shape == (M, num_classes)

    print("KERNEL_OK")
</pallas_src>

<mosaic_0001>
module attributes {stable_mosaic.version = 11 : i64} {
  func.func @_pred_kernel(%arg0: i32, %arg1: memref<1x32x49xf32, #tpu.memory_space<vmem>>, %arg2: memref<32x32xf32, #tpu.memory_space<vmem>>, %arg3: memref<32x1xf32, #tpu.memory_space<vmem>>, %arg4: memref<65x32xf32, #tpu.memory_space<vmem>>, %arg5: memref<65x1xf32, #tpu.memory_space<vmem>>, %arg6: memref<1x65x49xf32, #tpu.memory_space<vmem>>) attributes {dimension_semantics = [#tpu.dimension_semantics<parallel>], iteration_bounds = array<i64: 2>, scalar_prefetch = 0 : i64, scratch_operands = 0 : i64, tpu.core_type = #tpu.core_type<tc>, window_params = [{transform_indices = @transform_0, window_bounds = array<i64: 1, 32, 49>}, {pipeline_mode = #tpu.pipeline_mode<synchronous>, transform_indices = @transform_1, window_bounds = array<i64: 32, 32>}, {pipeline_mode = #tpu.pipeline_mode<synchronous>, transform_indices = @transform_2, window_bounds = array<i64: 32, 1>}, {pipeline_mode = #tpu.pipeline_mode<synchronous>, transform_indices = @transform_3, window_bounds = array<i64: 65, 32>}, {pipeline_mode = #tpu.pipeline_mode<synchronous>, transform_indices = @transform_4, window_bounds = array<i64: 65, 1>}, {transform_indices = @transform_5, window_bounds = array<i64: 1, 65, 49>}]} {
    %c0 = arith.constant 0 : index
    %c0_0 = arith.constant 0 : index
    %0 = vector.load %arg2[%c0, %c0_0] : memref<32x32xf32, #tpu.memory_space<vmem>>, vector<32x32xf32>
    %c0_1 = arith.constant 0 : index
    %c0_2 = arith.constant 0 : index
    %1 = vector.load %arg4[%c0_1, %c0_2] : memref<65x32xf32, #tpu.memory_space<vmem>>, vector<65x32xf32>
    %c0_3 = arith.constant 0 : index
    %c0_4 = arith.constant 0 : index
    %2 = vector.load %arg3[%c0_3, %c0_4] : memref<32x1xf32, #tpu.memory_space<vmem>>, vector<32x1xf32>
    %c0_5 = arith.constant 0 : index
    %c0_6 = arith.constant 0 : index
    %3 = vector.load %arg5[%c0_5, %c0_6] : memref<65x1xf32, #tpu.memory_space<vmem>>, vector<65x1xf32>
    %4 = tpu.iota {dimensions = array<i32: 0>} : vector<65x1xi32>
    %c5_i32 = arith.constant 5 : i32
    %c0_i32 = arith.constant 0 : i32
    %5 = arith.cmpi eq, %c5_i32, %c0_i32 : i32
    %c1_i32 = arith.constant 1 : i32
    %6 = arith.select %5, %c1_i32, %c5_i32 : i32
    %7 = vector.broadcast %6 : i32 to vector<65x1xi32>
    %8 = arith.remsi %4, %7 : vector<65x1xi32>
    %c0_i32_7 = arith.constant 0 : i32
    %9 = vector.broadcast %c0_i32_7 : i32 to vector<65x1xi32>
    %10 = arith.cmpi ne, %8, %9 : vector<65x1xi32>
    %c0_i32_8 = arith.constant 0 : i32
    %11 = vector.broadcast %c0_i32_8 : i32 to vector<65x1xi32>
    %12 = arith.cmpi slt, %8, %11 : vector<65x1xi32>
    %c0_i32_9 = arith.constant 0 : i32
    %13 = arith.cmpi slt, %6, %c0_i32_9 : i32
    %14 = vector.broadcast %13 : i1 to vector<65x1xi1>
    %15 = vector.broadcast %14 : vector<65x1xi1> to vector<65x1xi1>
    %16 = arith.xori %12, %15 : vector<65x1xi1>
    %17 = arith.andi %16, %10 : vector<65x1xi1>
    %18 = vector.broadcast %6 : i32 to vector<65x1xi32>
    %19 = arith.addi %8, %18 : vector<65x1xi32>
    %20 = arith.select %17, %19, %8 : vector<65x1xi1>, vector<65x1xi32>
    %c45_i32 = arith.constant 45 : i32
    %21 = vector.broadcast %c45_i32 : i32 to vector<65x1xi32>
    %22 = arith.cmpi slt, %4, %21 : vector<65x1xi32>
    %c3_i32 = arith.constant 3 : i32
    %23 = vector.broadcast %c3_i32 : i32 to vector<65x1xi32>
    %24 = arith.cmpi slt, %20, %23 : vector<65x1xi32>
    %25 = arith.andi %22, %24 : vector<65x1xi1>
    %c1_i32_10 = arith.constant 1 : i32
    %26 = vector.broadcast %c1_i32_10 : i32 to vector<65x1xi32>
    %27 = arith.cmpi sge, %20, %26 : vector<65x1xi32>
    %28 = arith.andi %22, %27 : vector<65x1xi1>
    %c3_i32_11 = arith.constant 3 : i32
    %29 = vector.broadcast %c3_i32_11 : i32 to vector<65x1xi32>
    %30 = arith.cmpi slt, %20, %29 : vector<65x1xi32>
    %31 = arith.andi %28, %30 : vector<65x1xi1>
    %cst = arith.constant 5.000000e-01 : f32
    %cst_12 = arith.constant 0.000000e+00 : f32
    %32 = vector.broadcast %cst : f32 to vector<65x1xf32>
    %33 = vector.broadcast %cst_12 : f32 to vector<65x1xf32>
    %34 = arith.select %31, %32, %33 : vector<65x1xi1>, vector<65x1xf32>
    %c0_13 = arith.constant 0 : index
    %c0_14 = arith.constant 0 : index
    %c0_15 = arith.constant 0 : index
    %35 = vector.load %arg1[%c0_13, %c0_14, %c0_15] : memref<1x32x49xf32, #tpu.memory_space<vmem>>, vector<1x32x49xf32>
    %36 = vector.shape_cast %35 : vector<1x32x49xf32> to vector<32x49xf32>
    %cst_16 = arith.constant dense<0.000000e+00> : vector<32x49xf32>
    %37 = tpu.matmul %0, %36, %cst_16 {dimension_numbers = #tpu.dot_dimension_numbers<[1], [0], [0], [1], [0, 0, 1, 1], [], []>} : vector<32x32xf32>, vector<32x49xf32>, vector<32x49xf32> -> vector<32x49xf32>
    %38 = vector.broadcast %2 : vector<32x1xf32> to vector<32x49xf32>
    %39 = arith.addf %37, %38 : vector<32x49xf32>
    %cst_17 = arith.constant 0.000000e+00 : f32
    %40 = vector.broadcast %cst_17 : f32 to vector<32x49xf32>
    %41 = arith.cmpf ogt, %39, %40 : vector<32x49xf32>
    %cst_18 = arith.constant 0.00999999977 : f32
    %42 = vector.broadcast %cst_18 : f32 to vector<32x49xf32>
    %43 = arith.mulf %42, %39 : vector<32x49xf32>
    %44 = arith.select %41, %39, %43 : vector<32x49xi1>, vector<32x49xf32>
    %cst_19 = arith.constant dense<0.000000e+00> : vector<65x49xf32>
    %45 = tpu.matmul %1, %44, %cst_19 {dimension_numbers = #tpu.dot_dimension_numbers<[1], [0], [0], [1], [0, 0, 1, 1], [], []>} : vector<65x32xf32>, vector<32x49xf32>, vector<65x49xf32> -> vector<65x49xf32>
    %46 = vector.broadcast %3 : vector<65x1xf32> to vector<65x49xf32>
    %47 = arith.addf %45, %46 : vector<65x49xf32>
    %cst_20 = arith.constant 0.000000e+00 : f32
    %48 = vector.broadcast %cst_20 : f32 to vector<65x49xf32>
    %49 = arith.subf %48, %47 : vector<65x49xf32>
    %50 = math.exp %49 : vector<65x49xf32>
    %cst_21 = arith.constant 1.000000e+00 : f32
    %51 = vector.broadcast %cst_21 : f32 to vector<65x49xf32>
    %52 = arith.addf %51, %50 : vector<65x49xf32>
    %53 = tpu.reciprocal %52 {approx = true} : vector<65x49xf32> -> vector<65x49xf32>
    %54 = vector.shape_cast %25 : vector<65x1xi1> to vector<65x1xi1>
    %55 = vector.broadcast %54 : vector<65x1xi1> to vector<65x49xi1>
    %56 = arith.select %55, %53, %47 : vector<65x49xi1>, vector<65x49xf32>
    %57 = vector.broadcast %34 : vector<65x1xf32> to vector<65x49xf32>
    %58 = arith.subf %56, %57 : vector<65x49xf32>
    %c0_22 = arith.constant 0 : index
    %c0_23 = arith.constant 0 : index
    %c0_24 = arith.constant 0 : index
    %59 = vector.load %arg6[%c0_22, %c0_23, %c0_24] : memref<1x65x49xf32, #tpu.memory_space<vmem>>, vector<1x65x49xf32>
    %60 = vector.shape_cast %59 : vector<1x65x49xf32> to vector<65x49xf32>
    %61 = vector.shape_cast %58 : vector<65x49xf32> to vector<1x65x49xf32>
    tpu.vector_store %arg6[%c0_22, %c0_23, %c0_24], %61 {strides = array<i32>} : memref<1x65x49xf32, #tpu.memory_space<vmem>>, vector<1x65x49xf32>,
    return
  }
  func.func @transform_0(%arg0: i32) -> (i32, i32, i32) {
    %c0_i32 = arith.constant 0 : i32
    %c0_i32_0 = arith.constant 0 : i32
    %c0_i32_1 = arith.constant 0 : i32
    return %arg0, %c0_i32, %c0_i32_0 : i32, i32, i32
  }
  func.func @transform_1(%arg0: i32) -> (i32, i32) {
    %c0_i32 = arith.constant 0 : i32
    %c0_i32_0 = arith.constant 0 : i32
    %c0_i32_1 = arith.constant 0 : i32
    return %c0_i32, %c0_i32_0 : i32, i32
  }
  func.func @transform_2(%arg0: i32) -> (i32, i32) {
    %c0_i32 = arith.constant 0 : i32
    %c0_i32_0 = arith.constant 0 : i32
    %c0_i32_1 = arith.constant 0 : i32
    return %c0_i32, %c0_i32_0 : i32, i32
  }
  func.func @transform_3(%arg0: i32) -> (i32, i32) {
    %c0_i32 = arith.constant 0 : i32
    %c0_i32_0 = arith.constant 0 : i32
    %c0_i32_1 = arith.constant 0 : i32
    return %c0_i32, %c0_i32_0 : i32, i32
  }
  func.func @transform_4(%arg0: i32) -> (i32, i32) {
    %c0_i32 = arith.constant 0 : i32
    %c0_i32_0 = arith.constant 0 : i32
    %c0_i32_1 = arith.constant 0 : i32
    return %c0_i32, %c0_i32_0 : i32, i32
  }
  func.func @transform_5(%arg0: i32) -> (i32, i32, i32) {
    %c0_i32 = arith.constant 0 : i32
    %c0_i32_0 = arith.constant 0 : i32
    %c0_i32_1 = arith.constant 0 : i32
    return %arg0, %c0_i32, %c0_i32_0 : i32, i32, i32
  }
}

</mosaic_0001>

<llo_original>
// kernel: tpu_custom_call.1
$region0: #{tpu_custom_call.1}
  #allocation0 [shape = 'u32[]', space=smem, size = 0x4, offset = 0x4, fixed_abs, tag = 'smem constant byte address 0x4 - core index']
  #allocation1 [shape = 'u32[144,128]{1,0:T(1,128)}', space=vmem, size = 0x12000, scoped, tag = 'internal scratch']
  %s0 = inlined_call_operand.vmem [shape: f32[2,32,49], index: 0, kind: input, shape index: {}]
  %s1 = inlined_call_operand.vmem [shape: f32[32,32], index: 1, kind: input, shape index: {}]
  %s2 = inlined_call_operand.vmem [shape: f32[32,1], index: 2, kind: input, shape index: {}]
  %s3 = inlined_call_operand.vmem [shape: f32[65,32], index: 3, kind: input, shape index: {}]
  %s4 = inlined_call_operand.vmem [shape: f32[65,1], index: 4, kind: input, shape index: {}]
  %s5 = inlined_call_operand.vmem [shape: f32[2,65,49], index: 5, kind: output, shape index: {}]
  %s6 = sld [smem:[#allocation0]]
  $region53: #{tpu_custom_call.1} parent=0
    _
  %s8 = ssub.s32 1, %s6
  %s9 = scalar_select 0, %s8, %s6
  loop: start=0, step=1, limit=4
  $region2: #{tpu_custom_call.1} parent=0 // loop_pre_header
    _
  $region3: #{tpu_custom_call.1} parent=0 // loop_header
    %s11 = sphi 0, %s15
    %p12 = scmp.ge.s32.totalorder %s11, 4
    %s21 = sphi 0, %s23
    %s24 = sphi 0, %s21
    %s25 = sphi 0, %s24
    %s41 = sphi 0, %s25
    %s45 = sphi 0, %s45
    %s47 = sphi 0, %s45
    %s48 = sphi 0, %s47
    %s62 = sphi 0, %s48
    %s66 = sphi 0, %s66
    %s68 = sphi 0, %s66
    %s69 = sphi 0, %s68
    %s83 = sphi 0, %s69
    %s87 = sphi 0, %s87
    %s89 = sphi 0, %s87
    %s90 = sphi 0, %s89
    %s104 = sphi 0, %s90
    %s108 = sphi 0, %s108
    %s110 = sphi 0, %s108
    %s111 = sphi 0, %s110
    %s125 = sphi 0, %s111
    %s131 = sphi 0, %s133
    %s134 = sphi 0, %s131
    %s135 = sphi 0, %s134
    %s151 = sphi 0, %s135
  $region4: #{tpu_custom_call.1} parent=0 // loop_header_branch
    %14 = sbr.rel (%p12) target = $region8
  $region5: #{tpu_custom_call.1} parent=0 // loop_body
    %s16 = ssub.s32 %s11, 1
    %s17 = ssub.s32 %s11, 2
    %s18 = sadd.s32 %s11, 1
    %s19 = ssub.s32 %s11, %s18
    %p20 = scmp.eq.s32.totalorder %s19, 0
    %s22 = sadd.s32 %s21, 1
    %s23 = scalar_select %p20, %s21, %s22
    %p26 = pneg %p20
    %p27 = scmp.eq.s32.totalorder %s11, 1
    %p28 = por %p26, %p27
    %p29 = scmp.ne.s32.totalorder %s21, %s24
    %p30 = scmp.eq.s32.totalorder %s11, 0
    %p31 = por %p29, %p30
    %p32 = scmp.ne.s32.totalorder %s21, %s24
    %p33 = scmp.eq.s32.totalorder %s16, 1
    %p34 = por %p32, %p33
    %p35 = scmp.ne.s32.totalorder %s24, %s25
    %p36 = scmp.eq.s32.totalorder %s16, 0
    %p37 = por %p35, %p36
    %p38 = scmp.ne.s32.totalorder %s24, %s25
    %p39 = scmp.eq.s32.totalorder %s17, 1
    %p40 = por %p38, %p39
    %p42 = scmp.ne.s32.totalorder %s25, %s41
    %p43 = scmp.eq.s32.totalorder %s17, 0
    %p44 = por %p42, %p43
    %s46 = sadd.s32 %s45, 1
    %p49 = scmp.eq.s32.totalorder %s11, 1
    %p50 = scmp.ne.s32.totalorder %s45, %s47
    %p51 = scmp.eq.s32.totalorder %s11, 0
    %p52 = por %p50, %p51
    %p53 = scmp.ne.s32.totalorder %s45, %s47
    %p54 = scmp.eq.s32.totalorder %s16, 1
    %p55 = por %p53, %p54
    %p56 = scmp.ne.s32.totalorder %s47, %s48
    %p57 = scmp.eq.s32.totalorder %s16, 0
    %p58 = por %p56, %p57
    %p59 = scmp.ne.s32.totalorder %s47, %s48
    %p60 = scmp.eq.s32.totalorder %s17, 1
    %p61 = por %p59, %p60
    %p63 = scmp.ne.s32.totalorder %s48, %s62
    %p64 = scmp.eq.s32.totalorder %s17, 0
    %p65 = por %p63, %p64
    %s67 = sadd.s32 %s66, 1
    %p70 = scmp.eq.s32.totalorder %s11, 1
    %p71 = scmp.ne.s32.totalorder %s66, %s68
    %p72 = scmp.eq.s32.totalorder %s11, 0
    %p73 = por %p71, %p72
    %p74 = scmp.ne.s32.totalorder %s66, %s68
    %p75 = scmp.eq.s32.totalorder %s16, 1
    %p76 = por %p74, %p75
    %p77 = scmp.ne.s32.totalorder %s68, %s69
    %p78 = scmp.eq.s32.totalorder %s16, 0
    %p79 = por %p77, %p78
    %p80 = scmp.ne.s32.totalorder %s68, %s69
    %p81 = scmp.eq.s32.totalorder %s17, 1
    %p82 = por %p80, %p81
    %p84 = scmp.ne.s32.totalorder %s69, %s83
    %p85 = scmp.eq.s32.totalorder %s17, 0
    %p86 = por %p84, %p85
    %s88 = sadd.s32 %s87, 1
    %p91 = scmp.eq.s32.totalorder %s11, 1
    %p92 = scmp.ne.s32.totalorder %s87, %s89
    %p93 = scmp.eq.s32.totalorder %s11, 0
    %p94 = por %p92, %p93
    %p95 = scmp.ne.s32.totalorder %s87, %s89
    %p96 = scmp.eq.s32.totalorder %s16, 1
    %p97 = por %p95, %p96
    %p98 = scmp.ne.s32.totalorder %s89, %s90
    %p99 = scmp.eq.s32.totalorder %s16, 0
    %p100 = por %p98, %p99
    %p101 = scmp.ne.s32.totalorder %s89, %s90
    %p102 = scmp.eq.s32.totalorder %s17, 1
    %p103 = por %p101, %p102
    %p105 = scmp.ne.s32.totalorder %s90, %s104
    %p106 = scmp.eq.s32.totalorder %s17, 0
    %p107 = por %p105, %p106
    %s109 = sadd.s32 %s108, 1
    %p112 = scmp.eq.s32.totalorder %s11, 1
    %p113 = scmp.ne.s32.totalorder %s108, %s110
    %p114 = scmp.eq.s32.totalorder %s11, 0
    %p115 = por %p113, %p114
    %p116 = scmp.ne.s32.totalorder %s108, %s110
    %p117 = scmp.eq.s32.totalorder %s16, 1
    %p118 = por %p116, %p117
    %p119 = scmp.ne.s32.totalorder %s110, %s111
    %p120 = scmp.eq.s32.totalorder %s16, 0
    %p121 = por %p119, %p120
    %p122 = scmp.ne.s32.totalorder %s110, %s111
    %p123 = scmp.eq.s32.totalorder %s17, 1
    %p124 = por %p122, %p123
    %p126 = scmp.ne.s32.totalorder %s111, %s125
    %p127 = scmp.eq.s32.totalorder %s17, 0
    %p128 = por %p126, %p127
    %s129 = ssub.s32 %s11, %s18
    %p130 = scmp.eq.s32.totalorder %s129, 0
    %s132 = sadd.s32 %s131, 1
    %s133 = scalar_select %p130, %s131, %s132
    %p136 = pneg %p130
    %p137 = scmp.eq.s32.totalorder %s11, 1
    %p138 = por %p136, %p137
    %p139 = scmp.ne.s32.totalorder %s131, %s134
    %p140 = scmp.eq.s32.totalorder %s11, 0
    %p141 = por %p139, %p140
    %p142 = scmp.ne.s32.totalorder %s131, %s134
    %p143 = scmp.eq.s32.totalorder %s16, 1
    %p144 = por %p142, %p143
    %p145 = scmp.ne.s32.totalorder %s134, %s135
    %p146 = scmp.eq.s32.totalorder %s16, 0
    %p147 = por %p145, %p146
    %p148 = scmp.ne.s32.totalorder %s134, %s135
    %p149 = scmp.eq.s32.totalorder %s17, 1
    %p150 = por %p148, %p149
    %p152 = scmp.ne.s32.totalorder %s135, %s151
    %p153 = scmp.eq.s32.totalorder %s17, 0
    %p154 = por %p152, %p153
    %p155 = scmp.le.s32.totalorder 1, %s11
    %p156 = scmp.lt.s32.totalorder %s11, 3
    %p157 = pnand %p155, %p156
    %p158 = pneg %p157
    // Predicated region
    $region9: #{tpu_custom_call.1} parent=5 // pred_check
      _
    $region10: #{tpu_custom_call.1} parent=5 // pred_check_branch
      %160 = sbr.rel (%p157) target = $region12
    $region11: #{tpu_custom_call.1} parent=5 // pred_region
      %s161 = ssub.s32 %s11, 1
      // Predicated region
      $region13: #{tpu_custom_call.1} parent=11 // pred_check
        %p162 = pneg %p58
      $region14: #{tpu_custom_call.1} parent=11 // pred_check_branch
        %164 = sbr.rel (%p162) target = $region16
      $region15: #{tpu_custom_call.1} parent=11 // pred_region
        _
      $region16: #{tpu_custom_call.1} parent=11 // pred_fallthru
        _
      // Predicated region
      $region17: #{tpu_custom_call.1} parent=11 // pred_check
        %p165 = pneg %p79
      $region18: #{tpu_custom_call.1} parent=11 // pred_check_branch
        %167 = sbr.rel (%p165) target = $region20
      $region19: #{tpu_custom_call.1} parent=11 // pred_region
        _
      $region20: #{tpu_custom_call.1} parent=11 // pred_fallthru
        _
      // Predicated region
      $region21: #{tpu_custom_call.1} parent=11 // pred_check
        %p168 = pneg %p100
      $region22: #{tpu_custom_call.1} parent=11 // pred_check_branch
        %170 = sbr.rel (%p168) target = $region24
      $region23: #{tpu_custom_call.1} parent=11 // pred_region
        _
      $region24: #{tpu_custom_call.1} parent=11 // pred_fallthru
        _
      // Predicated region
      $region25: #{tpu_custom_call.1} parent=11 // pred_check
        %p171 = pneg %p121
      $region26: #{tpu_custom_call.1} parent=11 // pred_check_branch
        %173 = sbr.rel (%p171) target = $region28
      $region27: #{tpu_custom_call.1} parent=11 // pred_region
        _
      $region28: #{tpu_custom_call.1} parent=11 // pred_fallthru
        _
    $region12: #{tpu_custom_call.1} parent=5 // pred_fallthru
      _
    %p174 = scmp.lt.s32.totalorder %s11, 2
    // Predicated region
    $region29: #{tpu_custom_call.1} parent=5 // pred_check
      %p175 = pneg %p174
    $region30: #{tpu_custom_call.1} parent=5 // pred_check_branch
      %177 = sbr.rel (%p175) target = $region32
    $region31: #{tpu_custom_call.1} parent=5 // pred_region
      // Predicated region
      $region33: #{tpu_custom_call.1} parent=31 // pred_check
        %p178 = pneg %p31
      $region34: #{tpu_custom_call.1} parent=31 // pred_check_branch
        %180 = sbr.rel (%p178) target = $region36
      $region35: #{tpu_custom_call.1} parent=31 // pred_region
        %p181 = scmp.lt.s32.totalorder %s11, 1
        %s182 = scalar_select %p181, %s11, 1
        %s183 = smul.addr %s182, 4
        %s184 = smul.addr %s183, 8
        %s185 = scalar_lea.vmem %s0, %s184
      $region36: #{tpu_custom_call.1} parent=31 // pred_fallthru
        _
    $region32: #{tpu_custom_call.1} parent=5 // pred_fallthru
      _
    %p186 = scmp.le.s32.totalorder 1, %s11
    %p187 = scmp.lt.s32.totalorder %s11, 3
    %p188 = pnand %p186, %p187
    %p189 = pneg %p188
    // Predicated region
    $region37: #{tpu_custom_call.1} parent=5 // pred_check
      _
    $region38: #{tpu_custom_call.1} parent=5 // pred_check_branch
      %191 = sbr.rel (%p188) target = $region40
    $region39: #{tpu_custom_call.1} parent=5 // pred_region
      %s192 = ssub.s32 %s11, 1
      %p193 = scmp.lt.s32.totalorder %s16, 1
      %s194 = scalar_select %p193, %s16, 1
      %s195 = smul.addr %s194, 4
      %s196 = smul.addr %s195, 8
      %s197 = scalar_lea.vmem %s0, %s196
      %p198 = pneg %p37
      %p199 = pneg %p34
      %p200 = pneg %p58
      %p201 = pneg %p55
      %p202 = pneg %p79
      %p203 = pneg %p76
      %p204 = pneg %p100
      %p205 = pneg %p97
      %p206 = pneg %p121
      %p207 = pneg %p118
      %p208 = pneg %p147
      %p209 = pneg %p144
      %p210 = scmp.lt.s32.totalorder %s16, 1
      %s211 = scalar_select %p210, %s16, 1
      %s212 = smul.addr %s211, 9
      %s213 = smul.addr %s212, 8
      %s214 = scalar_lea.vmem %s5, %s213
      %p215 = scmp.lt.s32.totalorder %s16, 1
      %s216 = scalar_select %p215, %s16, 1
      %s217 = smul.addr %s216, 4
      %s218 = smul.addr %s217, 8
      %s219 = scalar_lea.vmem %s0, %s218
      %p220 = scmp.lt.s32.totalorder %s16, 1
      %s221 = scalar_select %p220, %s16, 1
      %s222 = smul.addr %s221, 9
      %s223 = smul.addr %s222, 8
      %s224 = scalar_lea.vmem %s5, %s223
      %v225 = vld [vmem:[%s1] sm:$0xff]
      %v226 = vld [vmem:[%s1 + $0x8] sm:$0xff]
      %v227 = vld [vmem:[%s1 + $0x10] sm:$0xff]
      %v228 = vld [vmem:[%s1 + $0x18] sm:$0xff]
      %v229 = vld [vmem:[%s3] sm:$0xff]
      %v230 = vld [vmem:[%s3 + $0x8] sm:$0xff]
      %v231 = vld [vmem:[%s3 + $0x10] sm:$0xff]
      %v232 = vld [vmem:[%s3 + $0x18] sm:$0xff]
      %v233 = vld [vmem:[%s3 + $0x20] sm:$0xff]
      %v234 = vld [vmem:[%s3 + $0x28] sm:$0xff]
      %v235 = vld [vmem:[%s3 + $0x30] sm:$0xff]
      %v236 = vld [vmem:[%s3 + $0x38] sm:$0xff]
      %v237 = vld [vmem:[%s3 + $0x40] sm:$0x1]
      %v238 = vld [vmem:[%s2] sm:$0xff]
      %v239 = vld [vmem:[%s2 + $0x8] sm:$0xff]
      %v240 = vld [vmem:[%s2 + $0x10] sm:$0xff]
      %v241 = vld [vmem:[%s2 + $0x18] sm:$0xff]
      %v242 = vld [vmem:[%s4] sm:$0xff]
      %v243 = vld [vmem:[%s4 + $0x8] sm:$0xff]
      %v244 = vld [vmem:[%s4 + $0x10] sm:$0xff]
      %v245 = vld [vmem:[%s4 + $0x18] sm:$0xff]
      %v246 = vld [vmem:[%s4 + $0x20] sm:$0xff]
      %v247 = vld [vmem:[%s4 + $0x28] sm:$0xff]
      %v248 = vld [vmem:[%s4 + $0x30] sm:$0xff]
      %v249 = vld [vmem:[%s4 + $0x38] sm:$0xff]
      %v250 = vld [vmem:[%s4 + $0x40] sm:$0x1]
      %v251 = vlaneseq
      %v252 = vshrl.u32 %v251, 7
      %v253 = vadd.s32 %v252, 8
      %v254 = vadd.s32 %v252, 16
      %v255 = vadd.s32 %v252, 24
      %v256 = vadd.s32 %v252, 32
      %v257 = vadd.s32 %v252, 40
      %v258 = vadd.s32 %v252, 48
      %v259 = vadd.s32 %v252, 56
      %v260 = vadd.s32 %v252, 64
      %vm261 = vcmp.lt.s32.totalorder %v252, 0
      %v262 = vsub.s32 0, %v252
      %v263 = vsel %vm261, %v262, %v252
      %v264 = vmul.u32.u64.compose %v263, 3435973837
      %v265 = vextract.low.u32 %v264
      %v266 = vextract.high.u32 %v264
      %v267 = vshrl.u32 %v266, 2
      %v268 = vmul.u32 %v267, 5
      %v269 = vsub.s32 %v263, %v268
      %v270 = vsub.s32 0, %v269
      %v271 = vsel %vm261, %v270, %v269
      %vm272 = vcmp.lt.s32.totalorder %v253, 0
      %v273 = vsub.s32 0, %v253
      %v274 = vsel %vm272, %v273, %v253
      %v275 = vmul.u32.u64.compose %v274, 3435973837
      %v276 = vextract.low.u32 %v275
      %v277 = vextract.high.u32 %v275
      %v278 = vshrl.u32 %v277, 2
      %v279 = vmul.u32 %v278, 5
      %v280 = vsub.s32 %v274, %v279
      %v281 = vsub.s32 0, %v280
      %v282 = vsel %vm272, %v281, %v280
      %vm283 = vcmp.lt.s32.totalorder %v254, 0
      %v284 = vsub.s32 0, %v254
      %v285 = vsel %vm283, %v284, %v254
      %v286 = vmul.u32.u64.compose %v285, 3435973837
      %v287 = vextract.low.u32 %v286
      %v288 = vextract.high.u32 %v286
      %v289 = vshrl.u32 %v288, 2
      %v290 = vmul.u32 %v289, 5
      %v291 = vsub.s32 %v285, %v290
      %v292 = vsub.s32 0, %v291
      %v293 = vsel %vm283, %v292, %v291
      %vm294 = vcmp.lt.s32.totalorder %v255, 0
      %v295 = vsub.s32 0, %v255
      %v296 = vsel %vm294, %v295, %v255
      %v297 = vmul.u32.u64.compose %v296, 3435973837
      %v298 = vextract.low.u32 %v297
      %v299 = vextract.high.u32 %v297
      %v300 = vshrl.u32 %v299, 2
      %v301 = vmul.u32 %v300, 5
      %v302 = vsub.s32 %v296, %v301
      %v303 = vsub.s32 0, %v302
      %v304 = vsel %vm294, %v303, %v302
      %vm305 = vcmp.lt.s32.totalorder %v256, 0
      %v306 = vsub.s32 0, %v256
      %v307 = vsel %vm305, %v306, %v256
      %v308 = vmul.u32.u64.compose %v307, 3435973837
      %v309 = vextract.low.u32 %v308
      %v310 = vextract.high.u32 %v308
      %v311 = vshrl.u32 %v310, 2
      %v312 = vmul.u32 %v311, 5
      %v313 = vsub.s32 %v307, %v312
      %v314 = vsub.s32 0, %v313
      %v315 = vsel %vm305, %v314, %v313
      %vm316 = vcmp.lt.s32.totalorder %v257, 0
      %v317 = vsub.s32 0, %v257
      %v318 = vsel %vm316, %v317, %v257
      %v319 = vmul.u32.u64.compose %v318, 3435973837
      %v320 = vextract.low.u32 %v319
      %v321 = vextract.high.u32 %v319
      %v322 = vshrl.u32 %v321, 2
      %v323 = vmul.u32 %v322, 5
      %v324 = vsub.s32 %v318, %v323
      %v325 = vsub.s32 0, %v324
      %v326 = vsel %vm316, %v325, %v324
      %vm327 = vcmp.lt.s32.totalorder %v258, 0
      %v328 = vsub.s32 0, %v258
      %v329 = vsel %vm327, %v328, %v258
      %v330 = vmul.u32.u64.compose %v329, 3435973837
      %v331 = vextract.low.u32 %v330
      %v332 = vextract.high.u32 %v330
      %v333 = vshrl.u32 %v332, 2
      %v334 = vmul.u32 %v333, 5
      %v335 = vsub.s32 %v329, %v334
      %v336 = vsub.s32 0, %v335
      %v337 = vsel %vm327, %v336, %v335
      %vm338 = vcmp.lt.s32.totalorder %v259, 0
      %v339 = vsub.s32 0, %v259
      %v340 = vsel %vm338, %v339, %v259
      %v341 = vmul.u32.u64.compose %v340, 3435973837
      %v342 = vextract.low.u32 %v341
      %v343 = vextract.high.u32 %v341
      %v344 = vshrl.u32 %v343, 2
      %v345 = vmul.u32 %v344, 5
      %v346 = vsub.s32 %v340, %v345
      %v347 = vsub.s32 0, %v346
      %v348 = vsel %vm338, %v347, %v346
      %vm349 = vcmp.lt.s32.totalorder %v260, 0
      %v350 = vsub.s32 0, %v260
      %v351 = vsel %vm349, %v350, %v260
      %v352 = vmul.u32.u64.compose %v351, 3435973837
      %v353 = vextract.low.u32 %v352
      %v354 = vextract.high.u32 %v352
      %v355 = vshrl.u32 %v354, 2
      %v356 = vmul.u32 %v355, 5
      %v357 = vsub.s32 %v351, %v356
      %v358 = vsub.s32 0, %v357
      %v359 = vsel %vm349, %v358, %v357
      %vm360 = vcmp.ne.s32.totalorder %v271, 0
      %vm361 = vcmp.ne.s32.totalorder %v282, 0
      %vm362 = vcmp.ne.s32.totalorder %v293, 0
      %vm363 = vcmp.ne.s32.totalorder %v304, 0
      %vm364 = vcmp.ne.s32.totalorder %v315, 0
      %vm365 = vcmp.ne.s32.totalorder %v326, 0
      %vm366 = vcmp.ne.s32.totalorder %v337, 0
      %vm367 = vcmp.ne.s32.totalorder %v348, 0
      %vm368 = vcmp.ne.s32.totalorder %v359, 0
      %vm369 = vcmp.lt.s32.totalorder %v271, 0
      %vm370 = vcmp.lt.s32.totalorder %v282, 0
      %vm371 = vcmp.lt.s32.totalorder %v293, 0
      %vm372 = vcmp.lt.s32.totalorder %v304, 0
      %vm373 = vcmp.lt.s32.totalorder %v315, 0
      %vm374 = vcmp.lt.s32.totalorder %v326, 0
      %vm375 = vcmp.lt.s32.totalorder %v337, 0
      %vm376 = vcmp.lt.s32.totalorder %v348, 0
      %vm377 = vcmp.lt.s32.totalorder %v359, 0
      %vm378 = vmand %vm369, %vm360
      %vm379 = vmand %vm370, %vm361
      %vm380 = vmand %vm371, %vm362
      %vm381 = vmand %vm372, %vm363
      %vm382 = vmand %vm373, %vm364
      %vm383 = vmand %vm374, %vm365
      %vm384 = vmand %vm375, %vm366
      %vm385 = vmand %vm376, %vm367
      %vm386 = vmand %vm377, %vm368
      %v387 = vadd.s32 %v271, 5
      %v388 = vadd.s32 %v282, 5
      %v389 = vadd.s32 %v293, 5
      %v390 = vadd.s32 %v304, 5
      %v391 = vadd.s32 %v315, 5
      %v392 = vadd.s32 %v326, 5
      %v393 = vadd.s32 %v337, 5
      %v394 = vadd.s32 %v348, 5
      %v395 = vadd.s32 %v359, 5
      %v396 = vsel %vm378, %v387, %v271
      %v397 = vsel %vm379, %v388, %v282
      %v398 = vsel %vm380, %v389, %v293
      %v399 = vsel %vm381, %v390, %v304
      %v400 = vsel %vm382, %v391, %v315
      %v401 = vsel %vm383, %v392, %v326
      %v402 = vsel %vm384, %v393, %v337
      %v403 = vsel %vm385, %v394, %v348
      %v404 = vsel %vm386, %v395, %v359
      %vm405 = vcmp.lt.s32.totalorder %v252, 45
      %vm406 = vcmp.lt.s32.totalorder %v253, 45
      %vm407 = vcmp.lt.s32.totalorder %v254, 45
      %vm408 = vcmp.lt.s32.totalorder %v255, 45
      %vm409 = vcmp.lt.s32.totalorder %v256, 45
      %vm410 = vcmp.lt.s32.totalorder %v257, 45
      %vm411 = vcmp.lt.s32.totalorder %v258, 45
      %vm412 = vcmp.lt.s32.totalorder %v259, 45
      %vm413 = vcmp.lt.s32.totalorder %v260, 45
      %vm414 = vcmp.lt.s32.totalorder %v396, 3
      %vm415 = vcmp.lt.s32.totalorder %v397, 3
      %vm416 = vcmp.lt.s32.totalorder %v398, 3
      %vm417 = vcmp.lt.s32.totalorder %v399, 3
      %vm418 = vcmp.lt.s32.totalorder %v400, 3
      %vm419 = vcmp.lt.s32.totalorder %v401, 3
      %vm420 = vcmp.lt.s32.totalorder %v402, 3
      %vm421 = vcmp.lt.s32.totalorder %v403, 3
      %vm422 = vcmp.lt.s32.totalorder %v404, 3
      %vm423 = vmand %vm405, %vm414
      %vm424 = vmand %vm406, %vm415
      %vm425 = vmand %vm407, %vm416
      %vm426 = vmand %vm408, %vm417
      %vm427 = vmand %vm409, %vm418
      %vm428 = vmand %vm410, %vm419
      %vm429 = vmand %vm411, %vm420
      %vm430 = vmand %vm412, %vm421
      %vm431 = vmand %vm413, %vm422
      %vm432 = vcmp.ge.s32.totalorder %v396, 1
      %vm433 = vcmp.ge.s32.totalorder %v397, 1
      %vm434 = vcmp.ge.s32.totalorder %v398, 1
      %vm435 = vcmp.ge.s32.totalorder %v399, 1
      %vm436 = vcmp.ge.s32.totalorder %v400, 1
      %vm437 = vcmp.ge.s32.totalorder %v401, 1
      %vm438 = vcmp.ge.s32.totalorder %v402, 1
      %vm439 = vcmp.ge.s32.totalorder %v403, 1
      %vm440 = vcmp.ge.s32.totalorder %v404, 1
      %vm441 = vmand %vm405, %vm432
      %vm442 = vmand %vm406, %vm433
      %vm443 = vmand %vm407, %vm434
      %vm444 = vmand %vm408, %vm435
      %vm445 = vmand %vm409, %vm436
      %vm446 = vmand %vm410, %vm437
      %vm447 = vmand %vm411, %vm438
      %vm448 = vmand %vm412, %vm439
      %vm449 = vmand %vm413, %vm440
      %vm450 = vmand %vm441, %vm414
      %vm451 = vmand %vm442, %vm415
      %vm452 = vmand %vm443, %vm416
      %vm453 = vmand %vm444, %vm417
      %vm454 = vmand %vm445, %vm418
      %vm455 = vmand %vm446, %vm419
      %vm456 = vmand %vm447, %vm420
      %vm457 = vmand %vm448, %vm421
      %vm458 = vmand %vm449, %vm422
      %v459 = vsel %vm450, 0.5, 0.0
      %v460 = vsel %vm451, 0.5, 0.0
      %v461 = vsel %vm452, 0.5, 0.0
      %v462 = vsel %vm453, 0.5, 0.0
      %v463 = vsel %vm454, 0.5, 0.0
      %v464 = vsel %vm455, 0.5, 0.0
      %v465 = vsel %vm456, 0.5, 0.0
      %v466 = vsel %vm457, 0.5, 0.0
      %v467 = vsel %vm458, 0.5, 0.0
      %v468 = vld [vmem:[%s219] sm:$0xff]
      %v469 = vld [vmem:[%s219 + $0x8] sm:$0xff]
      %v470 = vld [vmem:[%s219 + $0x10] sm:$0xff]
      %v471 = vld [vmem:[%s219 + $0x18] sm:$0xff]
      %473 = vset.pattern.permute.xlu0 0
      %474 = vperm.xlu0 %473, %v238
      %v475 = vpop.permute.xlu0 %474
      %478 = vset.pattern.permute.xlu0 0
      %479 = vperm.xlu0 %478, %v239
      %v480 = vpop.permute.xlu0 %479
      %483 = vset.pattern.permute.xlu0 0
      %484 = vperm.xlu0 %483, %v240
      %v485 = vpop.permute.xlu0 %484
      %488 = vset.pattern.permute.xlu0 0
      %489 = vperm.xlu0 %488, %v241
      %v490 = vpop.permute.xlu0 %489
      %vm492 = vcmask 261120
      %v494 = vsel %vm492, %v225, 0
      %v497 = vsel %vm492, %v226, 0
      %v500 = vsel %vm492, %v227, 0
      %v503 = vsel %vm492, %v228, 0
      %505 = vmatprep.subr.mxu0 0.0
      %506 = vmatpush1.msra.mxu0 0.0
      %507 = vmatprep.subr.mxu0 0.0
      %508 = vmatpush1.msra.mxu0 0.0
      %509 = vmatprep.subr.mxu0 0.0
      %510 = vmatpush1.msra.mxu0 0.0
      %511 = vmatprep.subr.mxu0 0.0
      %512 = vmatpush1.msra.mxu0 0.0
      %513 = vmatprep.subr.mxu0 0.0
      %514 = vmatpush1.msra.mxu0 0.0
      %515 = vmatprep.subr.mxu0 0.0
      %516 = vmatpush1.msra.mxu0 0.0
      %517 = vmatprep.subr.mxu0 0.0
      %518 = vmatpush1.msra.mxu0 0.0
      %519 = vmatprep.subr.mxu0 0.0
      %520 = vmatpush1.msra.mxu0 0.0
      %521 = vmatprep.subr.mxu0 0.0
      %522 = vmatpush1.msra.mxu0 0.0
      %523 = vmatprep.subr.mxu0 0.0
      %524 = vmatpush1.msra.mxu0 0.0
      %525 = vmatprep.subr.mxu0 0.0
      %526 = vmatpush1.msra.mxu0 0.0
      %527 = vmatprep.subr.mxu0 0.0
      %528 = vmatpush1.msra.mxu0 0.0
      %529 = vmatprep.subr.mxu0 0.0
      %530 = vmatpush1.msra.mxu0 %v471
      %531 = vmatprep.subr.mxu0 0.0
      %532 = vmatpush1.msra.mxu0 %v470
      %533 = vmatprep.subr.mxu0 0.0
      %534 = vmatpush1.msra.mxu0 %v469
      %535 = vmatprep.subr.mxu0 0.0
      %536 = vmatpush1.msra.mxu0 %v468
      %537 = vmatprep.subr.mxu0 0.0
      %538 = vmatpush2.msra.mxu0 0.0
      %539 = vmatprep.subr.mxu0 0.0
      %540 = vmatpush2.msra.mxu0 0.0
      %541 = vmatprep.subr.mxu0 0.0
      %542 = vmatpush2.msra.mxu0 0.0
      %543 = vmatprep.subr.mxu0 0.0
      %544 = vmatpush2.msra.mxu0 0.0
      %545 = vmatprep.subr.mxu0 0.0
      %546 = vmatpush2.msra.mxu0 0.0
      %547 = vmatprep.subr.mxu0 0.0
      %548 = vmatpush2.msra.mxu0 0.0
      %549 = vmatprep.subr.mxu0 0.0
      %550 = vmatpush2.msra.mxu0 0.0
      %551 = vmatprep.subr.mxu0 0.0
      %552 = vmatpush2.msra.mxu0 0.0
      %553 = vmatprep.subr.mxu0 0.0
      %554 = vmatpush2.msra.mxu0 0.0
      %555 = vmatprep.subr.mxu0 0.0
      %556 = vmatpush2.msra.mxu0 0.0
      %557 = vmatprep.subr.mxu0 0.0
      %558 = vmatpush2.msra.mxu0 0.0
      %559 = vmatprep.subr.mxu0 0.0
      %560 = vmatpush2.msra.mxu0 0.0
      %561 = vmatprep.subr.mxu0 0.0
      %562 = vmatpush2.msra.mxu0 0.0
      %563 = vmatprep.subr.mxu0 0.0
      %564 = vmatpush2.msra.mxu0 0.0
      %565 = vmatprep.subr.mxu0 0.0
      %566 = vmatpush2.msra.mxu0 0.0
      %567 = vmatprep.subr.mxu0 0.0
      %568 = vmatpush2.msra.mxu0 0.0
      %569 = vmatprep.mubr.f32.mxu0 0.0
      %570 = vmatmul.mubr.f32.gmra.mxu0 %v494
      %v571 = vpop.f32.mrf.mxu0
      %v572 = vadd.f32 %v475, %v571
      %v573 = vpop.f32.mrf.mxu0
      %574 = vmatprep.mubr.f32.mxu0 0.0
      %575 = vmatmul.mubr.f32.gmra.mxu0 %v497
      %v576 = vpop.f32.mrf.mxu0
      %v577 = vadd.f32 %v480, %v576
      %v578 = vpop.f32.mrf.mxu0
      %579 = vmatprep.mubr.f32.mxu0 0.0
      %580 = vmatmul.mubr.f32.gmra.mxu0 %v500
      %v581 = vpop.f32.mrf.mxu0
      %v582 = vadd.f32 %v485, %v581
      %v583 = vpop.f32.mrf.mxu0
      %584 = vmatprep.mubr.f32.mxu0 0.0
      %585 = vmatmul.mubr.f32.gmra.mxu0 %v503
      %v586 = vpop.f32.mrf.mxu0
      %v587 = vadd.f32 %v490, %v586
      %v588 = vpop.f32.mrf.mxu0
      %589 = vdwg.mxu0
      %vm590 = vcmp.gt.f32.partialorder %v572, 0.0
      %vm591 = vcmp.gt.f32.partialorder %v577, 0.0
      %vm592 = vcmp.gt.f32.partialorder %v582, 0.0
      %vm593 = vcmp.gt.f32.partialorder %v587, 0.0
      %v594 = vmul.f32 %v572, 0.01
      %v595 = vmul.f32 %v577, 0.01
      %v596 = vmul.f32 %v582, 0.01
      %v597 = vmul.f32 %v587, 0.01
      %v598 = vsel %vm590, %v572, %v594
      %v599 = vsel %vm591, %v577, %v595
      %v600 = vsel %vm592, %v582, %v596
      %v601 = vsel %vm593, %v587, %v597
      %603 = vset.pattern.permute.xlu0 0
      %604 = vperm.xlu0 %603, %v242
      %v605 = vpop.permute.xlu0 %604
      %608 = vset.pattern.permute.xlu0 0
      %609 = vperm.xlu0 %608, %v243
      %v610 = vpop.permute.xlu0 %609
      %613 = vset.pattern.permute.xlu0 0
      %614 = vperm.xlu0 %613, %v244
      %v615 = vpop.permute.xlu0 %614
      %618 = vset.pattern.permute.xlu0 0
      %619 = vperm.xlu0 %618, %v245
      %v620 = vpop.permute.xlu0 %619
      %623 = vset.pattern.permute.xlu0 0
      %624 = vperm.xlu0 %623, %v246
      %v625 = vpop.permute.xlu0 %624
      %628 = vset.pattern.permute.xlu0 0
      %629 = vperm.xlu0 %628, %v247
      %v630 = vpop.permute.xlu0 %629
      %633 = vset.pattern.permute.xlu0 0
      %634 = vperm.xlu0 %633, %v248
      %v635 = vpop.permute.xlu0 %634
      %638 = vset.pattern.permute.xlu0 0
      %639 = vperm.xlu0 %638, %v249
      %v640 = vpop.permute.xlu0 %639
      %643 = vset.pattern.permute.xlu0 0
      %644 = vperm.xlu0 %643, %v250
      %v645 = vpop.permute.xlu0 %644
      %v648 = vsel %vm492, %v229, 0
      %v651 = vsel %vm492, %v230, 0
      %v654 = vsel %vm492, %v231, 0
      %v657 = vsel %vm492, %v232, 0
      %v660 = vsel %vm492, %v233, 0
      %v663 = vsel %vm492, %v234, 0
      %v666 = vsel %vm492, %v235, 0
      %v669 = vsel %vm492, %v236, 0
      %v672 = vsel %vm492, %v237, 0
      %674 = vmatprep.subr.mxu0 0.0
      %675 = vmatpush1.msra.mxu0 0.0
      %676 = vmatprep.subr.mxu0 0.0
      %677 = vmatpush1.msra.mxu0 0.0
      %678 = vmatprep.subr.mxu0 0.0
      %679 = vmatpush1.msra.mxu0 0.0
      %680 = vmatprep.subr.mxu0 0.0
      %681 = vmatpush1.msra.mxu0 0.0
      %682 = vmatprep.subr.mxu0 0.0
      %683 = vmatpush1.msra.mxu0 0.0
      %684 = vmatprep.subr.mxu0 0.0
      %685 = vmatpush1.msra.mxu0 0.0
      %686 = vmatprep.subr.mxu0 0.0
      %687 = vmatpush1.msra.mxu0 0.0
      %688 = vmatprep.subr.mxu0 0.0
      %689 = vmatpush1.msra.mxu0 0.0
      %690 = vmatprep.subr.mxu0 0.0
      %691 = vmatpush1.msra.mxu0 0.0
      %692 = vmatprep.subr.mxu0 0.0
      %693 = vmatpush1.msra.mxu0 0.0
      %694 = vmatprep.subr.mxu0 0.0
      %695 = vmatpush1.msra.mxu0 0.0
      %696 = vmatprep.subr.mxu0 0.0
      %697 = vmatpush1.msra.mxu0 0.0
      %698 = vmatprep.subr.mxu0 0.0
      %699 = vmatpush1.msra.mxu0 %v601
      %700 = vmatprep.subr.mxu0 0.0
      %701 = vmatpush1.msra.mxu0 %v600
      %702 = vmatprep.subr.mxu0 0.0
      %703 = vmatpush1.msra.mxu0 %v599
      %704 = vmatprep.subr.mxu0 0.0
      %705 = vmatpush1.msra.mxu0 %v598
      %706 = vmatprep.subr.mxu0 0.0
      %707 = vmatpush2.msra.mxu0 0.0
      %708 = vmatprep.subr.mxu0 0.0
      %709 = vmatpush2.msra.mxu0 0.0
      %710 = vmatprep.subr.mxu0 0.0
      %711 = vmatpush2.msra.mxu0 0.0
      %712 = vmatprep.subr.mxu0 0.0
      %713 = vmatpush2.msra.mxu0 0.0
      %714 = vmatprep.subr.mxu0 0.0
      %715 = vmatpush2.msra.mxu0 0.0
      %716 = vmatprep.subr.mxu0 0.0
      %717 = vmatpush2.msra.mxu0 0.0
      %718 = vmatprep.subr.mxu0 0.0
      %719 = vmatpush2.msra.mxu0 0.0
      %720 = vmatprep.subr.mxu0 0.0
      %721 = vmatpush2.msra.mxu0 0.0
      %722 = vmatprep.subr.mxu0 0.0
      %723 = vmatpush2.msra.mxu0 0.0
      %724 = vmatprep.subr.mxu0 0.0
      %725 = vmatpush2.msra.mxu0 0.0
      %726 = vmatprep.subr.mxu0 0.0
      %727 = vmatpush2.msra.mxu0 0.0
      %728 = vmatprep.subr.mxu0 0.0
      %729 = vmatpush2.msra.mxu0 0.0
      %730 = vmatprep.subr.mxu0 0.0
      %731 = vmatpush2.msra.mxu0 0.0
      %732 = vmatprep.subr.mxu0 0.0
      %733 = vmatpush2.msra.mxu0 0.0
      %734 = vmatprep.subr.mxu0 0.0
      %735 = vmatpush2.msra.mxu0 0.0
      %736 = vmatprep.subr.mxu0 0.0
      %737 = vmatpush2.msra.mxu0 0.0
      %738 = vmatprep.mubr.f32.mxu0 0.0
      %739 = vmatmul.mubr.f32.gmra.mxu0 %v648
      %v740 = vpop.f32.mrf.mxu0
      %v741 = vadd.f32 %v605, %v740
      %v742 = vpop.f32.mrf.mxu0
      %743 = vmatprep.mubr.f32.mxu0 0.0
      %744 = vmatmul.mubr.f32.gmra.mxu0 %v651
      %v745 = vpop.f32.mrf.mxu0
      %v746 = vadd.f32 %v610, %v745
      %v747 = vpop.f32.mrf.mxu0
      %748 = vmatprep.mubr.f32.mxu0 0.0
      %749 = vmatmul.mubr.f32.gmra.mxu0 %v654
      %v750 = vpop.f32.mrf.mxu0
      %v751 = vadd.f32 %v615, %v750
      %v752 = vpop.f32.mrf.mxu0
      %753 = vmatprep.mubr.f32.mxu0 0.0
      %754 = vmatmul.mubr.f32.gmra.mxu0 %v657
      %v755 = vpop.f32.mrf.mxu0
      %v756 = vadd.f32 %v620, %v755
      %v757 = vpop.f32.mrf.mxu0
      %758 = vmatprep.mubr.f32.mxu0 0.0
      %759 = vmatmul.mubr.f32.gmra.mxu0 %v660
      %v760 = vpop.f32.mrf.mxu0
      %v761 = vadd.f32 %v625, %v760
      %v762 = vpop.f32.mrf.mxu0
      %763 = vmatprep.mubr.f32.mxu0 0.0
      %764 = vmatmul.mubr.f32.gmra.mxu0 %v663
      %v765 = vpop.f32.mrf.mxu0
      %v766 = vadd.f32 %v630, %v765
      %v767 = vpop.f32.mrf.mxu0
      %768 = vmatprep.mubr.f32.mxu0 0.0
      %769 = vmatmul.mubr.f32.gmra.mxu0 %v666
      %v770 = vpop.f32.mrf.mxu0
      %v771 = vadd.f32 %v635, %v770
      %v772 = vpop.f32.mrf.mxu0
      %773 = vmatprep.mubr.f32.mxu0 0.0
      %774 = vmatmul.mubr.f32.gmra.mxu0 %v669
      %v775 = vpop.f32.mrf.mxu0
      %v776 = vadd.f32 %v640, %v775
      %v777 = vpop.f32.mrf.mxu0
      %778 = vmatprep.mubr.f32.mxu0 0.0
      %779 = vmatmul.mubr.f32.gmra.mxu0 %v672
      %v780 = vpop.f32.mrf.mxu0
      %v781 = vadd.f32 %v645, %v780
      %v782 = vpop.f32.mrf.mxu0
      %783 = vdwg.mxu0
      %v784 = vsub.f32 0.0, %v741
      %v785 = vsub.f32 0.0, %v746
      %v786 = vsub.f32 0.0, %v751
      %v787 = vsub.f32 0.0, %v756
      %v788 = vsub.f32 0.0, %v761
      %v789 = vsub.f32 0.0, %v766
      %v790 = vsub.f32 0.0, %v771
      %v791 = vsub.f32 0.0, %v776
      %v792 = vsub.f32 0.0, %v781
      %v793 = vmul.f32 %v784, 1.442695
      %v794 = vpow.pop %v793
      %v795 = vmul.f32 %v785, 1.442695
      %v796 = vpow.pop %v795
      %v797 = vmul.f32 %v786, 1.442695
      %v798 = vpow.pop %v797
      %v799 = vmul.f32 %v787, 1.442695
      %v800 = vpow.pop %v799
      %v801 = vmul.f32 %v788, 1.442695
      %v802 = vpow.pop %v801
      %v803 = vmul.f32 %v789, 1.442695
      %v804 = vpow.pop %v803
      %v805 = vmul.f32 %v790, 1.442695
      %v806 = vpow.pop %v805
      %v807 = vmul.f32 %v791, 1.442695
      %v808 = vpow.pop %v807
      %v809 = vmul.f32 %v792, 1.442695
      %v810 = vpow.pop %v809
      %v811 = vadd.f32 %v794, 1.0
      %v812 = vadd.f32 %v796, 1.0
      %v813 = vadd.f32 %v798, 1.0
      %v814 = vadd.f32 %v800, 1.0
      %v815 = vadd.f32 %v802, 1.0
      %v816 = vadd.f32 %v804, 1.0
      %v817 = vadd.f32 %v806, 1.0
      %v818 = vadd.f32 %v808, 1.0
      %v819 = vadd.f32 %v810, 1.0
      %v820 = vrcp.pop %v811
      %v821 = vrcp.pop %v812
      %v822 = vrcp.pop %v813
      %v823 = vrcp.pop %v814
      %v824 = vrcp.pop %v815
      %v825 = vrcp.pop %v816
      %v826 = vrcp.pop %v817
      %v827 = vrcp.pop %v818
      %v828 = vrcp.pop %v819
      %v829 = vsel %vm423, 1, 0
      %v830 = vsel %vm424, 1, 0
      %v831 = vsel %vm425, 1, 0
      %v832 = vsel %vm426, 1, 0
      %v833 = vsel %vm427, 1, 0
      %v834 = vsel %vm428, 1, 0
      %v835 = vsel %vm429, 1, 0
      %v836 = vsel %vm430, 1, 0
      %v837 = vsel %vm431, 1, 0
      %vm838 = vcmp.eq.s32.totalorder %v829, 1
      %vm839 = vcmp.eq.s32.totalorder %v830, 1
      %vm840 = vcmp.eq.s32.totalorder %v831, 1
      %vm841 = vcmp.eq.s32.totalorder %v832, 1
      %vm842 = vcmp.eq.s32.totalorder %v833, 1
      %vm843 = vcmp.eq.s32.totalorder %v834, 1
      %vm844 = vcmp.eq.s32.totalorder %v835, 1
      %vm845 = vcmp.eq.s32.totalorder %v836, 1
      %vm846 = vcmp.eq.s32.totalorder %v837, 1
      %v847 = vsel %vm838, %v820, %v741
      %v848 = vsel %vm839, %v821, %v746
      %v849 = vsel %vm840, %v822, %v751
      %v850 = vsel %vm841, %v823, %v756
      %v851 = vsel %vm842, %v824, %v761
      %v852 = vsel %vm843, %v825, %v766
      %v853 = vsel %vm844, %v826, %v771
      %v854 = vsel %vm845, %v827, %v776
      %v855 = vsel %vm846, %v828, %v781
      %v856 = vsub.f32 %v847, %v459
      %v857 = vsub.f32 %v848, %v460
      %v858 = vsub.f32 %v849, %v461
      %v859 = vsub.f32 %v850, %v462
      %v860 = vsub.f32 %v851, %v463
      %v861 = vsub.f32 %v852, %v464
      %v862 = vsub.f32 %v853, %v465
      %v863 = vsub.f32 %v854, %v466
      %v864 = vsub.f32 %v855, %v467
      %vm865 = vcmask 400384
      %866 = vst.msk [vmem:[%s224] sm:$0xff] %vm865, %v856
      %867 = vst.msk [vmem:[%s224 + $0x8] sm:$0xff] %vm865, %v857
      %868 = vst.msk [vmem:[%s224 + $0x10] sm:$0xff] %vm865, %v858
      %869 = vst.msk [vmem:[%s224 + $0x18] sm:$0xff] %vm865, %v859
      %870 = vst.msk [vmem:[%s224 + $0x20] sm:$0xff] %vm865, %v860
      %871 = vst.msk [vmem:[%s224 + $0x28] sm:$0xff] %vm865, %v861
      %872 = vst.msk [vmem:[%s224 + $0x30] sm:$0xff] %vm865, %v862
      %873 = vst.msk [vmem:[%s224 + $0x38] sm:$0xff] %vm865, %v863
      %vm874 = vcmask 393216
      %875 = vst.msk [vmem:[%s224 + $0x40] sm:$0x1] %vm874, %v864
      %p876 = scmp.lt.s32.totalorder %s16, 1
      %s877 = scalar_select %p876, %s16, 1
      %s878 = smul.addr %s877, 9
      %s879 = smul.addr %s878, 8
      %s880 = scalar_lea.vmem %s5, %s879
      // Predicated region
      $region41: #{tpu_custom_call.1} parent=39 // pred_check
        %p881 = pneg %p144
      $region42: #{tpu_custom_call.1} parent=39 // pred_check_branch
        %883 = sbr.rel (%p881) target = $region44
      $region43: #{tpu_custom_call.1} parent=39 // pred_region
        _
      $region44: #{tpu_custom_call.1} parent=39 // pred_fallthru
        _
    $region40: #{tpu_custom_call.1} parent=5 // pred_fallthru
      _
    %p884 = scmp.le.s32.totalorder 2, %s11
    // Predicated region
    $region45: #{tpu_custom_call.1} parent=5 // pred_check
      %p885 = pneg %p884
    $region46: #{tpu_custom_call.1} parent=5 // pred_check_branch
      %887 = sbr.rel (%p885) target = $region48
    $region47: #{tpu_custom_call.1} parent=5 // pred_region
      %s888 = ssub.s32 %s11, 2
      // Predicated region
      $region49: #{tpu_custom_call.1} parent=47 // pred_check
        %p889 = pneg %p150
      $region50: #{tpu_custom_call.1} parent=47 // pred_check_branch
        %891 = sbr.rel (%p889) target = $region52
      $region51: #{tpu_custom_call.1} parent=47 // pred_region
        %p892 = scmp.lt.s32.totalorder %s17, 1
        %s893 = scalar_select %p892, %s17, 1
        %s894 = smul.addr %s893, 9
        %s895 = smul.addr %s894, 8
        %s896 = scalar_lea.vmem %s5, %s895
      $region52: #{tpu_custom_call.1} parent=47 // pred_fallthru
        _
    $region48: #{tpu_custom_call.1} parent=5 // pred_fallthru
      _
  $region6: #{tpu_custom_call.1} parent=0 // loop_footer
    %s15 = sadd.s32 1, %s11
  $region7: #{tpu_custom_call.1} parent=0 // loop_footer_branch
    %10 = sbr.rel target = $region3
  $region8: #{tpu_custom_call.1} parent=0 // loop_exit
    _

</llo_original>
